<compile_context>
chip_gen: v5e
topology: v5e:2x2
jax: 0.10.0
libtpu: 0.0.40
codegen_flags: <defaults>
</compile_context>

<pallas_src>
import jax
import jax.numpy as jnp
from jax.experimental import pallas as pl
from jax.experimental.pallas import tpu as pltpu


STATE_TYPES = {
    'action_mask': 0, 'state_depot_hoop': 1, 'have_raw_hoops': 2,
    'state_depot_bending_tube': 3, 'have_raw_bending_tube': 4,
    'station_state_inner_left': 5, 'station_state_inner_right': 6,
    'station_state_outer_left': 7, 'station_state_outer_right': 8,
    'cutting_machine_state': 9, 'is_full_products': 10,
    'produce_product_req': 11, 'time_step': 12, 'progress': 13,
    'worker_state_0': 14, 'worker_task_0': 15, 'worker_pose_0': 16,
    'worker_state_1': 17, 'worker_task_1': 18, 'worker_pose_1': 19,
    'agv_state_0': 20, 'agv_task_0': 21, 'agv_pose_0': 22,
    'agv_state_1': 23, 'agv_task_1': 24, 'agv_pose_1': 25,
    'box_state_0': 26, 'box_task_0': 27, 'box_pose_0': 28,
    'box_state_1': 29, 'box_task_1': 30, 'box_pose_1': 31,
}
NUM_STATE_TYPES = len(STATE_TYPES)  # 32


def _broadcast_table_kernel(table_ref, o_ref):
    # table_ref: (1, K)  -- flattened (32, D) embedding table, resident in VMEM
    # o_ref:     (tb, K) -- one batch tile, lane-dense writeback
    o_ref[...] = jnp.broadcast_to(table_ref[...], o_ref.shape)


def _pick_block_rows(batch, row_bytes):
    """Row-tile size: ~2 MiB output tiles, 8-aligned, >=2 blocks when possible."""
    if batch <= 8:
        # Single tile; block equals the full batch dim (always legal).
        return batch
    # ~2 MiB per output tile (double-buffered -> ~4 MiB, well inside scoped VMEM
    # on v5e/v6e (32/128 MiB) and v7x (32/64 MiB)).
    block = max(8, ((2 << 20) // max(row_bytes, 1)) // 8 * 8)
    # Guarantee at least 2 row blocks so v7x's two TensorCores both get work.
    max_block_for_two = max(8, (((batch + 1) // 2) + 7) // 8 * 8)
    block = min(block, max_block_for_two)
    return block


def broadcast_embedding_table(table, batch_size):
    """out[b, t, :] = table[t, :]  for b in [0, batch_size)."""
    v, d = table.shape
    k = v * d
    itemsize = jnp.dtype(table.dtype).itemsize

    # Lane-dense presentation: flatten the table to (1, 32*D) and emit a
    # (batch, 32*D) slab; reshape back to (batch, 32, D) in the wrapper.
    table_flat = table.reshape(1, k)

    row_bytes = k * itemsize
    block_rows = _pick_block_rows(batch_size, row_bytes)
    n_blocks = pl.cdiv(batch_size, block_rows)

    cost = pl.CostEstimate(
        flops=0,
        transcendentals=0,
        bytes_accessed=k * itemsize + batch_size * k * itemsize,
    )

    out_flat = pl.pallas_call(
        _broadcast_table_kernel,
        out_shape=jax.ShapeDtypeStruct((batch_size, k), table.dtype),
        grid_spec=pltpu.PrefetchScalarGridSpec(
            num_scalar_prefetch=0,
            grid=(n_blocks,),
            in_specs=[
                # Constant block index -> table is DMA'd once, stays in VMEM.
                pl.BlockSpec((1, k), lambda i: (0, 0)),
            ],
            out_specs=pl.BlockSpec((block_rows, k), lambda i: (i, 0)),
        ),
        compiler_params=pltpu.CompilerParams(
            dimension_semantics=("parallel",),
        ),
        cost_estimate=cost,
    )(table_flat)

    return out_flat.reshape(batch_size, v, d)


def vectorized_embedding_forward(state, table):
    """Mirror of VectorizedEmbedding.forward.

    indices[:, t] == t (statically) for every batch row, so the result is the
    embedding table broadcast over the batch dimension.
    """
    batch_size = state['action_mask'].shape[0]
    return broadcast_embedding_table(table, batch_size)


def init_embedding_params(key, num_embeddings, dim_embedding, dtype=jnp.float32):
    """nn.Embedding default init: weight ~ N(0, 1)."""
    return jax.random.normal(key, (num_embeddings, dim_embedding), dtype=dtype)


if __name__ == "__main__":
    key = jax.random.PRNGKey(0)
    k_tab, k_mask = jax.random.split(key)

    batch, dim_embedding = 2, 32
    table = init_embedding_params(k_tab, NUM_STATE_TYPES, dim_embedding)

    # Only 'action_mask' (for its batch dimension) is consulted by the forward.
    state = {'action_mask': jax.random.normal(k_mask, (batch, NUM_STATE_TYPES))}

    y = vectorized_embedding_forward(state, table)
    y = jax.block_until_ready(y)

    # Reference: identical math to torch's embedding(indices) with indices[:, t] = t.
    indices_ref = jnp.broadcast_to(
        jnp.arange(NUM_STATE_TYPES, dtype=jnp.int32)[None, :],
        (batch, NUM_STATE_TYPES))
    y_ref = table[indices_ref]
    assert y.shape == (batch, NUM_STATE_TYPES, dim_embedding)
    assert jnp.allclose(y, y_ref, atol=1e-6, rtol=1e-6)

    print("KERNEL_OK")
</pallas_src>

<mosaic_0001>
module attributes {stable_mosaic.version = 11 : i64} {
  func.func @_broadcast_table_kernel(%arg0: i32, %arg1: memref<1x1024xf32, #tpu.memory_space<vmem>>, %arg2: memref<2x1024xf32, #tpu.memory_space<vmem>>) attributes {dimension_semantics = [#tpu.dimension_semantics<parallel>], iteration_bounds = array<i64: 1>, scalar_prefetch = 0 : i64, scratch_operands = 0 : i64, tpu.core_type = #tpu.core_type<tc>, window_params = [{pipeline_mode = #tpu.pipeline_mode<synchronous>, transform_indices = @transform_0, window_bounds = array<i64: 1, 1024>}, {transform_indices = @transform_1, window_bounds = array<i64: 2, 1024>}]} {
    %c0 = arith.constant 0 : index
    %c0_0 = arith.constant 0 : index
    %0 = vector.load %arg1[%c0, %c0_0] : memref<1x1024xf32, #tpu.memory_space<vmem>>, vector<1x1024xf32>
    %1 = vector.shape_cast %0 : vector<1x1024xf32> to vector<1x1024xf32>
    %2 = vector.broadcast %1 : vector<1x1024xf32> to vector<2x1024xf32>
    %c0_1 = arith.constant 0 : index
    %c0_2 = arith.constant 0 : index
    %3 = vector.load %arg2[%c0_1, %c0_2] : memref<2x1024xf32, #tpu.memory_space<vmem>>, vector<2x1024xf32>
    tpu.vector_store %arg2[%c0_1, %c0_2], %2 {strides = array<i32>} : memref<2x1024xf32, #tpu.memory_space<vmem>>, vector<2x1024xf32>,
    return
  }
  func.func @transform_0(%arg0: i32) -> (i32, i32) {
    %c0_i32 = arith.constant 0 : i32
    %c0_i32_0 = arith.constant 0 : i32
    %c0_i32_1 = arith.constant 0 : i32
    return %c0_i32, %c0_i32_0 : i32, i32
  }
  func.func @transform_1(%arg0: i32) -> (i32, i32) {
    %c0_i32 = arith.constant 0 : i32
    %c0_i32_0 = arith.constant 0 : i32
    return %arg0, %c0_i32 : i32, i32
  }
}

</mosaic_0001>

<llo_original>
// kernel: tpu_custom_call.1
$region0: #{tpu_custom_call.1}
  #allocation0 [shape = 'u32[]', space=smem, size = 0x4, offset = 0x4, fixed_abs, tag = 'smem constant byte address 0x4 - core index']
  #allocation1 [shape = 'u32[72,128]{1,0:T(1,128)}', space=vmem, size = 0x9000, scoped, tag = 'internal scratch']
  %s0 = inlined_call_operand.hbm [shape: f32[1,1024], index: 0, kind: input, shape index: {}]
  %s1 = inlined_call_operand.hbm [shape: f32[2,1024], index: 1, kind: output, shape index: {}]
  %s2 = sld [smem:[#allocation0]]
  $region18: #{tpu_custom_call.1} parent=0
    _
  %s4 = ssub.s32 1, %s2
  %s5 = scalar_select 0, %s4, %s2
  $region1: #{tpu_custom_call.1} parent=0
    #allocation2 [shape = 'u8[4096]{0}', space=vmem, size = 0x1000, scoped, tag = 'input window, operand 0, single buffered']
    #allocation3 [shape = 's32[1]{0}', space=sflag, size = 0x4, scoped, tag = 'scoped memory for tpu_custom_call.1']
    #allocation4 [shape = 's32[1]{0}', space=sflag, size = 0x4, scoped, tag = 'scoped memory for tpu_custom_call.1']
    #allocation5 [shape = 'u8[8192]{0}', space=vmem, size = 0x2000, scoped, tag = 'output window, operand 0, single buffered']
    %6 = vsyncpa [#allocation3], 0
    %7 = vsyncpa [#allocation4], 0
    // Predicated region
    $region2: #{tpu_custom_call.1} parent=1 // pred_check
      _
    $region3: #{tpu_custom_call.1} parent=1 // pred_check_branch
      %9 = sbr.rel (0) target = $region5
    $region4: #{tpu_custom_call.1} parent=1 // pred_region
      %11 = vsyncadd [#allocation3], 0
      %s13 = sshll.u32 %s0, 4
      %s14 = int_to_ptr.hbm [resolvable:$true] %s13
      %s15 = sshll.u32 [#allocation2], 4
      %s16 = int_to_ptr.vmem [resolvable:$true] %s15
      %18 = dma.hbm_to_vmem [thread:$0]  %s14, 128, %s16, [#allocation3]
    $region5: #{tpu_custom_call.1} parent=1 // pred_fallthru
      _
    // Predicated region
    $region6: #{tpu_custom_call.1} parent=1 // pred_check
      _
    $region7: #{tpu_custom_call.1} parent=1 // pred_check_branch
      %20 = sbr.rel (0) target = $region9
    $region8: #{tpu_custom_call.1} parent=1 // pred_region
      %22 = dma.done [#allocation3], 128
    $region9: #{tpu_custom_call.1} parent=1 // pred_fallthru
      _
    %v23 = vld [vmem:[#allocation2] sm:$0xff]
    %v25 = vperm.slane %v23, 0
    %v26 = vperm.slane %v23, 1
    %v27 = vperm.slane %v23, 2
    %v28 = vperm.slane %v23, 3
    %v29 = vperm.slane %v23, 4
    %v30 = vperm.slane %v23, 5
    %v31 = vperm.slane %v23, 6
    %v32 = vperm.slane %v23, 7
    %v33 = vrot.slane %v26, 6
    %v34 = vrot.slane %v27, 4
    %v35 = vrot.slane %v28, 2
    %v36 = vrot.slane %v30, 6
    %v37 = vrot.slane %v31, 4
    %v38 = vrot.slane %v32, 2
    %vm39 = vcmask 1041408
    %v40 = vsel %vm39, %v25, %v33
    %vm41 = vcmask 1045508
    %v42 = vsel %vm41, %v34, %v35
    %vm43 = vcmask 1043456
    %v44 = vsel %vm43, %v40, %v42
    %v45 = vsel %vm39, %v29, %v36
    %v46 = vsel %vm41, %v37, %v38
    %v47 = vsel %vm43, %v45, %v46
    %50 = vst [vmem:[#allocation5] sm:$0xff] %v44
    %51 = vst [vmem:[#allocation5 + $0x8] sm:$0xff] %v47
    // Predicated region
    $region10: #{tpu_custom_call.1} parent=1 // pred_check
      _
    $region11: #{tpu_custom_call.1} parent=1 // pred_check_branch
      %53 = sbr.rel (0) target = $region13
    $region12: #{tpu_custom_call.1} parent=1 // pred_region
      %55 = vsyncadd [#allocation4], 0
      %s57 = sshll.u32 [#allocation5], 4
      %s58 = int_to_ptr.vmem [resolvable:$true] %s57
      %s59 = sshll.u32 %s1, 4
      %s60 = int_to_ptr.hbm [resolvable:$true] %s59
      %62 = dma.vmem_to_hbm [thread:$0]  %s58, 256, %s60, [#allocation4]
    $region13: #{tpu_custom_call.1} parent=1 // pred_fallthru
      _
    // Predicated region
    $region14: #{tpu_custom_call.1} parent=1 // pred_check
      _
    $region15: #{tpu_custom_call.1} parent=1 // pred_check_branch
      %64 = sbr.rel (0) target = $region17
    $region16: #{tpu_custom_call.1} parent=1 // pred_region
      %66 = dma.done [#allocation4], 256
    $region17: #{tpu_custom_call.1} parent=1 // pred_fallthru
      _
    %67 = vsyncpa [#allocation3], 1
    %68 = vsyncpa [#allocation4], 1

</llo_original>
